<compile_context>
chip_gen: v7x
topology: tpu7x:2x2x1
jax: 0.10.0
libtpu: 0.0.40
codegen_flags: <defaults>
</compile_context>

<pallas_src>
import jax
import jax.numpy as jnp
from jax.experimental import pallas as pl
from jax.experimental.pallas import tpu as pltpu

NEGATIVE_SLOPE = 0.01          # torch.nn.LeakyReLU default
_LANES = 1024                  # lane-dense last dim (multiple of 128)
_MAX_BLOCK_ROWS = 512          # 512*1024*4B = 2 MiB per buffer (v7x-safe with 2x buffering)
_PALLAS_MIN_SIZE = 8192        # below this the op is pure launch/DMA overhead -> inline JAX


def _leaky_relu(w):
    # vmul + vmax, no predicate vreg.  (Keep math in the weight dtype; init is f32.)
    return jnp.maximum(w, NEGATIVE_SLOPE * w)


# ------------------------------- Pallas kernels -------------------------------

def _leaky_relu_kernel(w_ref, o_ref):
    w = w_ref[...]
    o_ref[...] = jnp.maximum(w, NEGATIVE_SLOPE * w)


def _leaky_relu_sum_kernel(w_ref, sum_ref):
    # Fused LeakyReLU + sum; SMEM scalar output stays resident across grid steps.
    @pl.when(pl.program_id(0) == 0)
    def _():
        sum_ref[0, 0] = jnp.float32(0.0)

    w = w_ref[...]
    y = jnp.maximum(w, NEGATIVE_SLOPE * w)
    sum_ref[0, 0] += jnp.sum(y.astype(jnp.float32))


# ------------------------------- helpers / wrappers ----------------------------

def _prep(weight: jax.Array, max_block_rows: int):
    """Pad + reshape the flat weight into a lane-dense (rows_padded, _LANES) layout."""
    n = weight.shape[0]
    rows = max(1, -(-n // _LANES))
    if rows <= max_block_rows:
        block_rows = rows                     # full extent (no (8,128) divisibility needed)
        rows_padded = rows
    else:
        block_rows = max_block_rows           # multiple of 8
        rows_padded = -(-rows // block_rows) * block_rows
    padded = rows_padded * _LANES
    w2 = jnp.pad(weight, (0, padded - n)).reshape(rows_padded, _LANES)
    return w2, n, rows_padded, block_rows


def _forward_pallas(weight: jax.Array, max_block_rows: int = _MAX_BLOCK_ROWS) -> jax.Array:
    w2, n, rows_padded, block_rows = _prep(weight, max_block_rows)
    grid = (rows_padded // block_rows,)
    out2 = pl.pallas_call(
        _leaky_relu_kernel,
        out_shape=jax.ShapeDtypeStruct(w2.shape, w2.dtype),
        grid=grid,
        in_specs=[pl.BlockSpec((block_rows, _LANES), lambda i: (i, 0))],
        out_specs=pl.BlockSpec((block_rows, _LANES), lambda i: (i, 0)),
        compiler_params=pltpu.CompilerParams(
            dimension_semantics=("parallel",),
            vmem_limit_bytes=32 * 1024 * 1024,
        ),
    )(w2)
    return out2.reshape(-1)[:n]


def _mean_pallas(weight: jax.Array, max_block_rows: int = _MAX_BLOCK_ROWS) -> jax.Array:
    w2, n, rows_padded, block_rows = _prep(weight, max_block_rows)
    grid = (rows_padded // block_rows,)
    total = pl.pallas_call(
        _leaky_relu_sum_kernel,
        out_shape=jax.ShapeDtypeStruct((1, 1), jnp.float32),
        grid=grid,
        in_specs=[pl.BlockSpec((block_rows, _LANES), lambda i: (i, 0))],
        out_specs=pl.BlockSpec((1, 1), lambda i: (0, 0), memory_space=pltpu.SMEM),
        compiler_params=pltpu.CompilerParams(
            dimension_semantics=("arbitrary",),   # resident accumulator output
            vmem_limit_bytes=32 * 1024 * 1024,
        ),
    )(w2)
    # Padding rows are zeros -> LeakyReLU(0)=0 -> they do not perturb the sum.
    return (total[0, 0] / jnp.float32(n)).astype(weight.dtype)


def auxiliary_weight_forward(weight: jax.Array, x=None, *, force_pallas: bool = False) -> jax.Array:
    """Equivalent of AuxiliaryWeight.forward(x): LeakyReLU(weight); `x` is ignored."""
    del x  # forward() ignores its input entirely
    if force_pallas or weight.shape[0] >= _PALLAS_MIN_SIZE:
        return _forward_pallas(weight)
    # Tiny parameter (the normal case): inline elementwise op, fuses with surrounding XLA.
    return _leaky_relu(weight)


def auxiliary_weight_mean(weight: jax.Array, *, force_pallas: bool = False) -> jax.Array:
    """Equivalent of AuxiliaryWeight.mean()."""
    if force_pallas or weight.shape[0] >= _PALLAS_MIN_SIZE:
        return _mean_pallas(weight)
    return jnp.mean(_leaky_relu(weight))


def init_auxiliary_weight(size: int = 1, dtype=jnp.float32) -> jax.Array:
    # Deterministic init exactly as in the PyTorch module: ones of shape (size,).
    return jnp.ones((size,), dtype=dtype)


# ------------------------------------ demo ------------------------------------

if __name__ == "__main__":
    key = jax.random.PRNGKey(0)
    # `x` is accepted by forward() but completely ignored; build it anyway for parity.
    x = jax.random.normal(key, (2, 4, 16, 16), dtype=jnp.float32)

    # ---- small path (module default behaviour: ones of shape (size,)) ----
    size = 8
    weight = init_auxiliary_weight(size=size)
    out = jax.block_until_ready(auxiliary_weight_forward(weight, x))
    expected = jnp.where(weight >= 0, weight, NEGATIVE_SLOPE * weight)
    assert out.shape == (size,)
    assert jnp.allclose(out, expected), (out, expected)

    m = jax.block_until_ready(auxiliary_weight_mean(weight))
    assert jnp.allclose(m, jnp.mean(expected))

    # ---- Pallas path (scalable variant), exercised with negatives + padding ----
    big_n = 40 * 1024 + 37  # deliberately not a multiple of 1024 to test pad/slice
    big_w = jax.random.normal(jax.random.PRNGKey(0), (big_n,), dtype=jnp.float32)
    expected_big = jnp.where(big_w >= 0, big_w, NEGATIVE_SLOPE * big_w)

    # single-block Pallas call (rows <= 512 -> full-extent block, 1 grid step)
    out_big = jax.block_until_ready(auxiliary_weight_forward(big_w, force_pallas=True))
    assert out_big.shape == (big_n,)
    assert jnp.allclose(out_big, expected_big)

    # multi-step grid (small block_rows) to exercise pipelining + sum accumulation
    out_big2 = jax.block_until_ready(_forward_pallas(big_w, max_block_rows=8))
    assert jnp.allclose(out_big2, expected_big)

    m_big = jax.block_until_ready(_mean_pallas(big_w, max_block_rows=8))
    assert jnp.allclose(m_big, jnp.mean(expected_big), rtol=1e-5, atol=1e-5)

    m_big_public = jax.block_until_ready(auxiliary_weight_mean(big_w, force_pallas=True))
    assert jnp.allclose(m_big_public, jnp.mean(expected_big), rtol=1e-5, atol=1e-5)

    print("KERNEL_OK")
</pallas_src>

<mosaic_0001>
module attributes {stable_mosaic.version = 11 : i64} {
  func.func @_leaky_relu_kernel(%arg0: i32, %arg1: memref<41x1024xf32, #tpu.memory_space<vmem>>, %arg2: memref<41x1024xf32, #tpu.memory_space<vmem>>) attributes {dimension_semantics = [#tpu.dimension_semantics<parallel>], iteration_bounds = array<i64: 1>, scalar_prefetch = 0 : i64, scratch_operands = 0 : i64, tpu.core_type = #tpu.core_type<tc>, window_params = [{transform_indices = @transform_0, window_bounds = array<i64: 41, 1024>}, {transform_indices = @transform_1, window_bounds = array<i64: 41, 1024>}]} {
    %c0 = arith.constant 0 : index
    %c0_0 = arith.constant 0 : index
    %0 = vector.load %arg1[%c0, %c0_0] : memref<41x1024xf32, #tpu.memory_space<vmem>>, vector<41x1024xf32>
    %cst = arith.constant 0.00999999977 : f32
    %1 = vector.broadcast %cst : f32 to vector<41x1024xf32>
    %2 = arith.mulf %1, %0 : vector<41x1024xf32>
    %3 = arith.maximumf %0, %2 : vector<41x1024xf32>
    %c0_1 = arith.constant 0 : index
    %c0_2 = arith.constant 0 : index
    %4 = vector.load %arg2[%c0_1, %c0_2] : memref<41x1024xf32, #tpu.memory_space<vmem>>, vector<41x1024xf32>
    tpu.vector_store %arg2[%c0_1, %c0_2], %3 {strides = array<i32>} : memref<41x1024xf32, #tpu.memory_space<vmem>>, vector<41x1024xf32>,
    return
  }
  func.func @transform_0(%arg0: i32) -> (i32, i32) {
    %c0_i32 = arith.constant 0 : i32
    %c0_i32_0 = arith.constant 0 : i32
    return %arg0, %c0_i32 : i32, i32
  }
  func.func @transform_1(%arg0: i32) -> (i32, i32) {
    %c0_i32 = arith.constant 0 : i32
    %c0_i32_0 = arith.constant 0 : i32
    return %arg0, %c0_i32 : i32, i32
  }
}

</mosaic_0001>

<llo_original>
// kernel: tpu_custom_call.1
$region0: #{tpu_custom_call.1}
  #allocation0 [shape = 'u32[]', space=smem, size = 0x4, offset = 0x4, fixed_abs, tag = 'smem constant byte address 0x4 - core index']
  #allocation1 [shape = 'u32[144,128]{1,0:T(1,128)}', space=vmem, size = 0x12000, scoped, tag = 'internal scratch']
  %s0 = inlined_call_operand.hbm [shape: f32[41,1024], index: 0, kind: input, shape index: {}]
  %s1 = inlined_call_operand.hbm [shape: f32[41,1024], index: 1, kind: output, shape index: {}]
  %s2 = sld [smem:[#allocation0]]
  $region18: #{tpu_custom_call.1} parent=0
    _
  %s4 = ssub.s32 1, %s2
  %s5 = scalar_select 0, %s4, %s2
  $region1: #{tpu_custom_call.1} parent=0
    #allocation2 [shape = 'u8[196608]{0}', space=vmem, size = 0x30000, scoped, tag = 'input window, operand 0, single buffered']
    #allocation3 [shape = 's32[1]{0}', space=sflag, size = 0x4, scoped, tag = 'scoped memory for tpu_custom_call.1']
    #allocation4 [shape = 's32[1]{0}', space=sflag, size = 0x4, scoped, tag = 'scoped memory for tpu_custom_call.1']
    #allocation5 [shape = 'u8[196608]{0}', space=vmem, size = 0x30000, scoped, tag = 'output window, operand 0, single buffered']
    %6 = vsyncpa [#allocation3], 0
    %7 = vsyncpa [#allocation4], 0
    // Predicated region
    $region2: #{tpu_custom_call.1} parent=1 // pred_check
      _
    $region3: #{tpu_custom_call.1} parent=1 // pred_check_branch
      %9 = sbr.rel (0) target = $region5
    $region4: #{tpu_custom_call.1} parent=1 // pred_region
      %s11 = ssub.s32 6144, 6144
      %12 = vsyncadd [#allocation3], %s11
      %s13 = sshll.u32 [#allocation2], 4
      %s14 = int_to_ptr.vmem [resolvable:$true] %s13
      %19 = dma.hbm_to_vmem [thread:$0]  %s0, 6144, %s14, [#allocation3], 1024, 1024, 64
    $region5: #{tpu_custom_call.1} parent=1 // pred_fallthru
      _
    // Predicated region
    $region6: #{tpu_custom_call.1} parent=1 // pred_check
      _
    $region7: #{tpu_custom_call.1} parent=1 // pred_check_branch
      %21 = sbr.rel (0) target = $region9
    $region8: #{tpu_custom_call.1} parent=1 // pred_region
      %22 = dma.done [#allocation3], 6144
    $region9: #{tpu_custom_call.1} parent=1 // pred_fallthru
      _
    %v23 = vld [vmem:[#allocation2] sm:$0xff]
    %v24 = vld [vmem:[#allocation2 + $0x8] sm:$0xff]
    %v25 = vld [vmem:[#allocation2 + $0x10] sm:$0xff]
    %v26 = vld [vmem:[#allocation2 + $0x18] sm:$0xff]
    %v27 = vld [vmem:[#allocation2 + $0x20] sm:$0xff]
    %v28 = vld [vmem:[#allocation2 + $0x28] sm:$0xff]
    %v29 = vld [vmem:[#allocation2 + $0x30] sm:$0xff]
    %v30 = vld [vmem:[#allocation2 + $0x38] sm:$0xff]
    %v31 = vld [vmem:[#allocation2 + $0x40] sm:$0xff]
    %v32 = vld [vmem:[#allocation2 + $0x48] sm:$0xff]
    %v33 = vld [vmem:[#allocation2 + $0x50] sm:$0xff]
    %v34 = vld [vmem:[#allocation2 + $0x58] sm:$0xff]
    %v35 = vld [vmem:[#allocation2 + $0x60] sm:$0xff]
    %v36 = vld [vmem:[#allocation2 + $0x68] sm:$0xff]
    %v37 = vld [vmem:[#allocation2 + $0x70] sm:$0xff]
    %v38 = vld [vmem:[#allocation2 + $0x78] sm:$0xff]
    %v39 = vld [vmem:[#allocation2 + $0x80] sm:$0xff]
    %v40 = vld [vmem:[#allocation2 + $0x88] sm:$0xff]
    %v41 = vld [vmem:[#allocation2 + $0x90] sm:$0xff]
    %v42 = vld [vmem:[#allocation2 + $0x98] sm:$0xff]
    %v43 = vld [vmem:[#allocation2 + $0xa0] sm:$0xff]
    %v44 = vld [vmem:[#allocation2 + $0xa8] sm:$0xff]
    %v45 = vld [vmem:[#allocation2 + $0xb0] sm:$0xff]
    %v46 = vld [vmem:[#allocation2 + $0xb8] sm:$0xff]
    %v47 = vld [vmem:[#allocation2 + $0xc0] sm:$0xff]
    %v48 = vld [vmem:[#allocation2 + $0xc8] sm:$0xff]
    %v49 = vld [vmem:[#allocation2 + $0xd0] sm:$0xff]
    %v50 = vld [vmem:[#allocation2 + $0xd8] sm:$0xff]
    %v51 = vld [vmem:[#allocation2 + $0xe0] sm:$0xff]
    %v52 = vld [vmem:[#allocation2 + $0xe8] sm:$0xff]
    %v53 = vld [vmem:[#allocation2 + $0xf0] sm:$0xff]
    %v54 = vld [vmem:[#allocation2 + $0xf8] sm:$0xff]
    %v55 = vld [vmem:[#allocation2 + $0x100] sm:$0xff]
    %v56 = vld [vmem:[#allocation2 + $0x108] sm:$0xff]
    %v57 = vld [vmem:[#allocation2 + $0x110] sm:$0xff]
    %v58 = vld [vmem:[#allocation2 + $0x118] sm:$0xff]
    %v59 = vld [vmem:[#allocation2 + $0x120] sm:$0xff]
    %v60 = vld [vmem:[#allocation2 + $0x128] sm:$0xff]
    %v61 = vld [vmem:[#allocation2 + $0x130] sm:$0xff]
    %v62 = vld [vmem:[#allocation2 + $0x138] sm:$0xff]
    %v63 = vld [vmem:[#allocation2 + $0x140] sm:$0x1]
    %v64 = vld [vmem:[#allocation2 + $0x148] sm:$0x1]
    %v65 = vld [vmem:[#allocation2 + $0x150] sm:$0x1]
    %v66 = vld [vmem:[#allocation2 + $0x158] sm:$0x1]
    %v67 = vld [vmem:[#allocation2 + $0x160] sm:$0x1]
    %v68 = vld [vmem:[#allocation2 + $0x168] sm:$0x1]
    %v69 = vld [vmem:[#allocation2 + $0x170] sm:$0x1]
    %v70 = vld [vmem:[#allocation2 + $0x178] sm:$0x1]
    %v71 = vmul.f32 %v23, 0.01
    %v72 = vmul.f32 %v24, 0.01
    %v73 = vmul.f32 %v25, 0.01
    %v74 = vmul.f32 %v26, 0.01
    %v75 = vmul.f32 %v27, 0.01
    %v76 = vmul.f32 %v28, 0.01
    %v77 = vmul.f32 %v29, 0.01
    %v78 = vmul.f32 %v30, 0.01
    %v79 = vmul.f32 %v31, 0.01
    %v80 = vmul.f32 %v32, 0.01
    %v81 = vmul.f32 %v33, 0.01
    %v82 = vmul.f32 %v34, 0.01
    %v83 = vmul.f32 %v35, 0.01
    %v84 = vmul.f32 %v36, 0.01
    %v85 = vmul.f32 %v37, 0.01
    %v86 = vmul.f32 %v38, 0.01
    %v87 = vmul.f32 %v39, 0.01
    %v88 = vmul.f32 %v40, 0.01
    %v89 = vmul.f32 %v41, 0.01
    %v90 = vmul.f32 %v42, 0.01
    %v91 = vmul.f32 %v43, 0.01
    %v92 = vmul.f32 %v44, 0.01
    %v93 = vmul.f32 %v45, 0.01
    %v94 = vmul.f32 %v46, 0.01
    %v95 = vmul.f32 %v47, 0.01
    %v96 = vmul.f32 %v48, 0.01
    %v97 = vmul.f32 %v49, 0.01
    %v98 = vmul.f32 %v50, 0.01
    %v99 = vmul.f32 %v51, 0.01
    %v100 = vmul.f32 %v52, 0.01
    %v101 = vmul.f32 %v53, 0.01
    %v102 = vmul.f32 %v54, 0.01
    %v103 = vmul.f32 %v55, 0.01
    %v104 = vmul.f32 %v56, 0.01
    %v105 = vmul.f32 %v57, 0.01
    %v106 = vmul.f32 %v58, 0.01
    %v107 = vmul.f32 %v59, 0.01
    %v108 = vmul.f32 %v60, 0.01
    %v109 = vmul.f32 %v61, 0.01
    %v110 = vmul.f32 %v62, 0.01
    %v111 = vmul.f32 %v63, 0.01
    %v112 = vmul.f32 %v64, 0.01
    %v113 = vmul.f32 %v65, 0.01
    %v114 = vmul.f32 %v66, 0.01
    %v115 = vmul.f32 %v67, 0.01
    %v116 = vmul.f32 %v68, 0.01
    %v117 = vmul.f32 %v69, 0.01
    %v118 = vmul.f32 %v70, 0.01
    %v119 = vmax.f32 %v23, %v71
    %v120 = vmax.f32 %v24, %v72
    %v121 = vmax.f32 %v25, %v73
    %v122 = vmax.f32 %v26, %v74
    %v123 = vmax.f32 %v27, %v75
    %v124 = vmax.f32 %v28, %v76
    %v125 = vmax.f32 %v29, %v77
    %v126 = vmax.f32 %v30, %v78
    %v127 = vmax.f32 %v31, %v79
    %v128 = vmax.f32 %v32, %v80
    %v129 = vmax.f32 %v33, %v81
    %v130 = vmax.f32 %v34, %v82
    %v131 = vmax.f32 %v35, %v83
    %v132 = vmax.f32 %v36, %v84
    %v133 = vmax.f32 %v37, %v85
    %v134 = vmax.f32 %v38, %v86
    %v135 = vmax.f32 %v39, %v87
    %v136 = vmax.f32 %v40, %v88
    %v137 = vmax.f32 %v41, %v89
    %v138 = vmax.f32 %v42, %v90
    %v139 = vmax.f32 %v43, %v91
    %v140 = vmax.f32 %v44, %v92
    %v141 = vmax.f32 %v45, %v93
    %v142 = vmax.f32 %v46, %v94
    %v143 = vmax.f32 %v47, %v95
    %v144 = vmax.f32 %v48, %v96
    %v145 = vmax.f32 %v49, %v97
    %v146 = vmax.f32 %v50, %v98
    %v147 = vmax.f32 %v51, %v99
    %v148 = vmax.f32 %v52, %v100
    %v149 = vmax.f32 %v53, %v101
    %v150 = vmax.f32 %v54, %v102
    %v151 = vmax.f32 %v55, %v103
    %v152 = vmax.f32 %v56, %v104
    %v153 = vmax.f32 %v57, %v105
    %v154 = vmax.f32 %v58, %v106
    %v155 = vmax.f32 %v59, %v107
    %v156 = vmax.f32 %v60, %v108
    %v157 = vmax.f32 %v61, %v109
    %v158 = vmax.f32 %v62, %v110
    %v159 = vmax.f32 %v63, %v111
    %v160 = vmax.f32 %v64, %v112
    %v161 = vmax.f32 %v65, %v113
    %v162 = vmax.f32 %v66, %v114
    %v163 = vmax.f32 %v67, %v115
    %v164 = vmax.f32 %v68, %v116
    %v165 = vmax.f32 %v69, %v117
    %v166 = vmax.f32 %v70, %v118
    %167 = vst [vmem:[#allocation5] sm:$0xff] %v119
    %168 = vst [vmem:[#allocation5 + $0x8] sm:$0xff] %v120
    %169 = vst [vmem:[#allocation5 + $0x10] sm:$0xff] %v121
    %170 = vst [vmem:[#allocation5 + $0x18] sm:$0xff] %v122
    %171 = vst [vmem:[#allocation5 + $0x20] sm:$0xff] %v123
    %172 = vst [vmem:[#allocation5 + $0x28] sm:$0xff] %v124
    %173 = vst [vmem:[#allocation5 + $0x30] sm:$0xff] %v125
    %174 = vst [vmem:[#allocation5 + $0x38] sm:$0xff] %v126
    %175 = vst [vmem:[#allocation5 + $0x40] sm:$0xff] %v127
    %176 = vst [vmem:[#allocation5 + $0x48] sm:$0xff] %v128
    %177 = vst [vmem:[#allocation5 + $0x50] sm:$0xff] %v129
    %178 = vst [vmem:[#allocation5 + $0x58] sm:$0xff] %v130
    %179 = vst [vmem:[#allocation5 + $0x60] sm:$0xff] %v131
    %180 = vst [vmem:[#allocation5 + $0x68] sm:$0xff] %v132
    %181 = vst [vmem:[#allocation5 + $0x70] sm:$0xff] %v133
    %182 = vst [vmem:[#allocation5 + $0x78] sm:$0xff] %v134
    %183 = vst [vmem:[#allocation5 + $0x80] sm:$0xff] %v135
    %184 = vst [vmem:[#allocation5 + $0x88] sm:$0xff] %v136
    %185 = vst [vmem:[#allocation5 + $0x90] sm:$0xff] %v137
    %186 = vst [vmem:[#allocation5 + $0x98] sm:$0xff] %v138
    %187 = vst [vmem:[#allocation5 + $0xa0] sm:$0xff] %v139
    %188 = vst [vmem:[#allocation5 + $0xa8] sm:$0xff] %v140
    %189 = vst [vmem:[#allocation5 + $0xb0] sm:$0xff] %v141
    %190 = vst [vmem:[#allocation5 + $0xb8] sm:$0xff] %v142
    %191 = vst [vmem:[#allocation5 + $0xc0] sm:$0xff] %v143
    %192 = vst [vmem:[#allocation5 + $0xc8] sm:$0xff] %v144
    %193 = vst [vmem:[#allocation5 + $0xd0] sm:$0xff] %v145
    %194 = vst [vmem:[#allocation5 + $0xd8] sm:$0xff] %v146
    %195 = vst [vmem:[#allocation5 + $0xe0] sm:$0xff] %v147
    %196 = vst [vmem:[#allocation5 + $0xe8] sm:$0xff] %v148
    %197 = vst [vmem:[#allocation5 + $0xf0] sm:$0xff] %v149
    %198 = vst [vmem:[#allocation5 + $0xf8] sm:$0xff] %v150
    %199 = vst [vmem:[#allocation5 + $0x100] sm:$0xff] %v151
    %200 = vst [vmem:[#allocation5 + $0x108] sm:$0xff] %v152
    %201 = vst [vmem:[#allocation5 + $0x110] sm:$0xff] %v153
    %202 = vst [vmem:[#allocation5 + $0x118] sm:$0xff] %v154
    %203 = vst [vmem:[#allocation5 + $0x120] sm:$0xff] %v155
    %204 = vst [vmem:[#allocation5 + $0x128] sm:$0xff] %v156
    %205 = vst [vmem:[#allocation5 + $0x130] sm:$0xff] %v157
    %206 = vst [vmem:[#allocation5 + $0x138] sm:$0xff] %v158
    %207 = vst [vmem:[#allocation5 + $0x140] sm:$0x1] %v159
    %208 = vst [vmem:[#allocation5 + $0x148] sm:$0x1] %v160
    %209 = vst [vmem:[#allocation5 + $0x150] sm:$0x1] %v161
    %210 = vst [vmem:[#allocation5 + $0x158] sm:$0x1] %v162
    %211 = vst [vmem:[#allocation5 + $0x160] sm:$0x1] %v163
    %212 = vst [vmem:[#allocation5 + $0x168] sm:$0x1] %v164
    %213 = vst [vmem:[#allocation5 + $0x170] sm:$0x1] %v165
    %214 = vst [vmem:[#allocation5 + $0x178] sm:$0x1] %v166
    // Predicated region
    $region10: #{tpu_custom_call.1} parent=1 // pred_check
      _
    $region11: #{tpu_custom_call.1} parent=1 // pred_check_branch
      %216 = sbr.rel (0) target = $region13
    $region12: #{tpu_custom_call.1} parent=1 // pred_region
      %s218 = ssub.s32 6144, 6144
      %219 = vsyncadd [#allocation4], %s218
      %s220 = sshll.u32 [#allocation5], 4
      %s221 = int_to_ptr.vmem [resolvable:$true] %s220
      %226 = dma.vmem_to_hbm [thread:$0]  %s221, 6144, %s1, [#allocation4], 1024, 1024, 64
    $region13: #{tpu_custom_call.1} parent=1 // pred_fallthru
      _
    // Predicated region
    $region14: #{tpu_custom_call.1} parent=1 // pred_check
      _
    $region15: #{tpu_custom_call.1} parent=1 // pred_check_branch
      %228 = sbr.rel (0) target = $region17
    $region16: #{tpu_custom_call.1} parent=1 // pred_region
      %229 = dma.done [#allocation4], 6144
    $region17: #{tpu_custom_call.1} parent=1 // pred_fallthru
      _
    %230 = vsyncpa [#allocation3], 1
    %231 = vsyncpa [#allocation4], 1

</llo_original>
